<compile_context>
chip_gen: v7x
topology: tpu7x:2x2x1
jax: 0.10.0
libtpu: 0.0.40
codegen_flags: <defaults>
</compile_context>

<pallas_src>
import functools
import math

import jax
import jax.numpy as jnp
from jax.experimental import pallas as pl
from jax.experimental.pallas import tpu as pltpu


def _fused_conv_kernel(x_ref, keep_ref, wcur_ref, wprev_ref, b_ref, o_ref, *,
                       compute_dtype):
    x = x_ref[...]
    if compute_dtype is not None:
        # In-kernel cast rides idle VPU slots; x stays in its HBM dtype on the wire.
        x = x.astype(compute_dtype)

    # In-kernel t-1 shift: roll rows down by one (XLU slot, ~free) and zero the
    # first row of every length-L sequence via the resident keep-mask.  The row
    # tile is a multiple of L and tiles start on sequence boundaries, so the
    # roll wrap-around only ever lands on a masked row.
    x_prev = pltpu.roll(x, shift=1, axis=0) * keep_ref[...]

    # Two MXU pushes onto one fused (rows, 2C) tile: lanes [0:C]=conv1, [C:2C]=conv2.
    y = jnp.dot(x, wcur_ref[...], preferred_element_type=jnp.float32)
    y = y + jnp.dot(x_prev, wprev_ref[...], preferred_element_type=jnp.float32)
    y = y + b_ref[...]                      # f32 epilogue: bias + ReLU
    o_ref[...] = jnp.maximum(y, 0.0).astype(o_ref.dtype)


def _round_up(n, m):
    return ((n + m - 1) // m) * m


def symptom_conv_net(x, w1, b1, w2, b2, *, tile_rows=8192, compute_dtype=None,
                     return_fused=False):
    """x: (B, L, E) float32.
    w1: (E, C)     - Conv1d(E, C, 1) weight, transposed.
    b1: (C,)
    w2: (2, E, C)  - Conv1d(E, C, 2) weight taps, transposed: w2[k] is tap k.
    b2: (C,)
    Returns (out1, out2), each (B, L, C); or the fused (B, L, 2C) slab if
    return_fused=True (lanes [0:C]=conv1, [C:2C]=conv2).
    compute_dtype: optional matmul operand dtype (e.g. jnp.bfloat16 on v6e/v7x);
                   accumulation and epilogue remain f32.
    """
    B, L, E = x.shape
    C = w1.shape[1]
    rows = B * L
    out_dtype = x.dtype

    xf = x.reshape(rows, E)

    # Fused weights / bias: output lanes are [conv1 | conv2].
    w_cur = jnp.concatenate([w1, w2[1]], axis=1)                       # (E, 2C) -> x[t]
    w_prev = jnp.concatenate([jnp.zeros_like(w2[0]), w2[0]], axis=1)   # (E, 2C) -> x[t-1]
    b_cat = jnp.concatenate([b1, b2]).reshape(1, 2 * C).astype(jnp.float32)

    if compute_dtype is not None:
        # Only the tiny weights are cast host-side; x is cast inside the kernel.
        w_cur = w_cur.astype(compute_dtype)
        w_prev = w_prev.astype(compute_dtype)

    # Row-tile granularity: multiple of 8 (sublane rule) and of L (so the
    # in-kernel t-1 shift never crosses a sequence/tile boundary).
    gran = math.lcm(8, L)
    tr = max(gran, _round_up(min(tile_rows, rows), gran))
    if rows > gran:
        # Keep the grid >= 2 steps when rows allow so v7x's 2 TensorCores both
        # get work from the single "parallel" axis.
        half = _round_up((rows + 1) // 2, gran)
        tr = min(tr, half)
    rows_pad = _round_up(rows, tr)
    if rows_pad != rows:
        xf = jnp.pad(xf, ((0, rows_pad - rows), (0, 0)))
    grid = (rows_pad // tr,)

    # Keep-mask: 0.0 on the first row of each length-L sequence, 1.0 elsewhere.
    # Identical for every tile (tiles start on sequence boundaries) -> resident.
    mask_dtype = compute_dtype if compute_dtype is not None else xf.dtype
    keep = (jnp.arange(tr, dtype=jnp.int32) % L != 0).astype(mask_dtype).reshape(tr, 1)

    in_bytes = (xf.size * xf.dtype.itemsize
                + keep.size * keep.dtype.itemsize
                + (w_cur.size + w_prev.size) * w_cur.dtype.itemsize
                + b_cat.size * b_cat.dtype.itemsize)
    out_bytes = rows_pad * 2 * C * jnp.dtype(out_dtype).itemsize
    cost = pl.CostEstimate(
        flops=2 * 2 * rows_pad * E * (2 * C),   # two (rows_pad, E) @ (E, 2C) matmuls
        transcendentals=0,
        bytes_accessed=in_bytes + out_bytes,
    )

    # VMEM budget: x and out tiles are double-buffered; weights/bias/mask resident.
    block_bytes = tr * E * xf.dtype.itemsize + tr * 2 * C * jnp.dtype(out_dtype).itemsize
    resident_bytes = (keep.size * keep.dtype.itemsize
                      + (w_cur.size + w_prev.size) * w_cur.dtype.itemsize
                      + b_cat.size * b_cat.dtype.itemsize)
    vmem_need = 2 * block_bytes + resident_bytes + (1 << 20)   # headroom
    compiler_kwargs = dict(dimension_semantics=("parallel",))
    if vmem_need > (32 << 20):
        # Only raise the scoped limit when the tile actually needs it (v7x: 64 MiB physical).
        compiler_kwargs["vmem_limit_bytes"] = int(min(vmem_need, 60 << 20))

    grid_spec = pltpu.PrefetchScalarGridSpec(
        num_scalar_prefetch=0,
        grid=grid,
        in_specs=[
            pl.BlockSpec((tr, E), lambda i: (i, 0)),        # x rows tile (only big input)
            pl.BlockSpec((tr, 1), lambda i: (0, 0)),        # keep-mask (resident)
            pl.BlockSpec((E, 2 * C), lambda i: (0, 0)),     # fused W_cur (resident)
            pl.BlockSpec((E, 2 * C), lambda i: (0, 0)),     # fused W_prev (resident)
            pl.BlockSpec((1, 2 * C), lambda i: (0, 0)),     # fused bias (resident)
        ],
        out_specs=pl.BlockSpec((tr, 2 * C), lambda i: (i, 0)),
    )

    fused = pl.pallas_call(
        functools.partial(_fused_conv_kernel, compute_dtype=compute_dtype),
        out_shape=jax.ShapeDtypeStruct((rows_pad, 2 * C), out_dtype),
        grid_spec=grid_spec,
        compiler_params=pltpu.CompilerParams(**compiler_kwargs),
        cost_estimate=cost,
    )(xf, keep, w_cur, w_prev, b_cat)

    fused = fused[:rows].reshape(B, L, 2 * C)
    if return_fused:
        return fused
    return fused[..., :C], fused[..., C:]


def _reference(x, w1, b1, w2, b2):
    """Pure-JAX reference matching the PyTorch forward."""
    out1 = jax.nn.relu(jnp.einsum("ble,ec->blc", x, w1) + b1)
    x_prev = jnp.pad(x, ((0, 0), (1, 0), (0, 0)))[:, :-1, :]
    out2 = jax.nn.relu(jnp.einsum("ble,ec->blc", x_prev, w2[0])
                       + jnp.einsum("ble,ec->blc", x, w2[1]) + b2)
    return out1, out2


if __name__ == "__main__":
    B, L = 2, 8
    embed_size = 32
    out_channel_1 = 16

    key = jax.random.PRNGKey(0)
    kx, kw1, kb1, kw2, kb2 = jax.random.split(key, 5)

    x = jax.random.normal(kx, (B, L, embed_size), dtype=jnp.float32)
    # Deterministic "torch-like" init (nn.Conv1d weights, transposed to (E, C)).
    w1 = jax.random.normal(kw1, (embed_size, out_channel_1), dtype=jnp.float32) * 0.1
    b1 = jax.random.normal(kb1, (out_channel_1,), dtype=jnp.float32) * 0.1
    w2 = jax.random.normal(kw2, (2, embed_size, out_channel_1), dtype=jnp.float32) * 0.1
    b2 = jax.random.normal(kb2, (out_channel_1,), dtype=jnp.float32) * 0.1

    out1, out2 = symptom_conv_net(x, w1, b1, w2, b2)
    jax.block_until_ready((out1, out2))

    ref1, ref2 = _reference(x, w1, b1, w2, b2)
    assert out1.shape == (B, L, out_channel_1) and out2.shape == (B, L, out_channel_1)
    assert jnp.allclose(out1, ref1, atol=1e-5), "conv1 mismatch"
    assert jnp.allclose(out2, ref2, atol=1e-5), "conv2 mismatch"

    print("KERNEL_OK")
</pallas_src>

<mosaic_0001>
module attributes {stable_mosaic.version = 11 : i64} {
  func.func @_fused_conv_kernel(%arg0: i32, %arg1: memref<8x32xf32, #tpu.memory_space<vmem>>, %arg2: memref<8x1xf32, #tpu.memory_space<vmem>>, %arg3: memref<32x32xf32, #tpu.memory_space<vmem>>, %arg4: memref<32x32xf32, #tpu.memory_space<vmem>>, %arg5: memref<1x32xf32, #tpu.memory_space<vmem>>, %arg6: memref<8x32xf32, #tpu.memory_space<vmem>>) attributes {dimension_semantics = [#tpu.dimension_semantics<parallel>], iteration_bounds = array<i64: 2>, scalar_prefetch = 0 : i64, scratch_operands = 0 : i64, tpu.core_type = #tpu.core_type<tc>, window_params = [{transform_indices = @transform_0, window_bounds = array<i64: 8, 32>}, {pipeline_mode = #tpu.pipeline_mode<synchronous>, transform_indices = @transform_1, window_bounds = array<i64: 8, 1>}, {pipeline_mode = #tpu.pipeline_mode<synchronous>, transform_indices = @transform_2, window_bounds = array<i64: 32, 32>}, {pipeline_mode = #tpu.pipeline_mode<synchronous>, transform_indices = @transform_3, window_bounds = array<i64: 32, 32>}, {pipeline_mode = #tpu.pipeline_mode<synchronous>, transform_indices = @transform_4, window_bounds = array<i64: 1, 32>}, {transform_indices = @transform_5, window_bounds = array<i64: 8, 32>}]} {
    %c0 = arith.constant 0 : index
    %c0_0 = arith.constant 0 : index
    %0 = vector.load %arg1[%c0, %c0_0] : memref<8x32xf32, #tpu.memory_space<vmem>>, vector<8x32xf32>
    %c1_i32 = arith.constant 1 : i32
    %1 = tpu.dynamic_rotate %0 by %c1_i32 dim 0 : vector<8x32xf32>, i32 -> vector<8x32xf32>
    %c0_1 = arith.constant 0 : index
    %c0_2 = arith.constant 0 : index
    %2 = vector.load %arg2[%c0_1, %c0_2] : memref<8x1xf32, #tpu.memory_space<vmem>>, vector<8x1xf32>
    %3 = vector.broadcast %2 : vector<8x1xf32> to vector<8x32xf32>
    %4 = arith.mulf %1, %3 : vector<8x32xf32>
    %c0_3 = arith.constant 0 : index
    %c0_4 = arith.constant 0 : index
    %5 = vector.load %arg3[%c0_3, %c0_4] : memref<32x32xf32, #tpu.memory_space<vmem>>, vector<32x32xf32>
    %cst = arith.constant dense<0.000000e+00> : vector<8x32xf32>
    %6 = tpu.matmul %0, %5, %cst {dimension_numbers = #tpu.dot_dimension_numbers<[1], [0], [0], [1], [0, 0, 1, 1], [], []>} : vector<8x32xf32>, vector<32x32xf32>, vector<8x32xf32> -> vector<8x32xf32>
    %c0_5 = arith.constant 0 : index
    %c0_6 = arith.constant 0 : index
    %7 = vector.load %arg4[%c0_5, %c0_6] : memref<32x32xf32, #tpu.memory_space<vmem>>, vector<32x32xf32>
    %cst_7 = arith.constant dense<0.000000e+00> : vector<8x32xf32>
    %8 = tpu.matmul %4, %7, %cst_7 {dimension_numbers = #tpu.dot_dimension_numbers<[1], [0], [0], [1], [0, 0, 1, 1], [], []>} : vector<8x32xf32>, vector<32x32xf32>, vector<8x32xf32> -> vector<8x32xf32>
    %9 = arith.addf %6, %8 : vector<8x32xf32>
    %c0_8 = arith.constant 0 : index
    %c0_9 = arith.constant 0 : index
    %10 = vector.load %arg5[%c0_8, %c0_9] : memref<1x32xf32, #tpu.memory_space<vmem>>, vector<1x32xf32>
    %11 = vector.broadcast %10 : vector<1x32xf32> to vector<8x32xf32>
    %12 = arith.addf %9, %11 : vector<8x32xf32>
    %cst_10 = arith.constant 0.000000e+00 : f32
    %13 = vector.broadcast %cst_10 : f32 to vector<8x32xf32>
    %14 = arith.maximumf %12, %13 : vector<8x32xf32>
    %c0_11 = arith.constant 0 : index
    %c0_12 = arith.constant 0 : index
    %15 = vector.load %arg6[%c0_11, %c0_12] : memref<8x32xf32, #tpu.memory_space<vmem>>, vector<8x32xf32>
    tpu.vector_store %arg6[%c0_11, %c0_12], %14 {strides = array<i32>} : memref<8x32xf32, #tpu.memory_space<vmem>>, vector<8x32xf32>,
    return
  }
  func.func @transform_0(%arg0: i32) -> (i32, i32) {
    %c0_i32 = arith.constant 0 : i32
    %c0_i32_0 = arith.constant 0 : i32
    return %arg0, %c0_i32 : i32, i32
  }
  func.func @transform_1(%arg0: i32) -> (i32, i32) {
    %c0_i32 = arith.constant 0 : i32
    %c0_i32_0 = arith.constant 0 : i32
    %c0_i32_1 = arith.constant 0 : i32
    return %c0_i32, %c0_i32_0 : i32, i32
  }
  func.func @transform_2(%arg0: i32) -> (i32, i32) {
    %c0_i32 = arith.constant 0 : i32
    %c0_i32_0 = arith.constant 0 : i32
    %c0_i32_1 = arith.constant 0 : i32
    return %c0_i32, %c0_i32_0 : i32, i32
  }
  func.func @transform_3(%arg0: i32) -> (i32, i32) {
    %c0_i32 = arith.constant 0 : i32
    %c0_i32_0 = arith.constant 0 : i32
    %c0_i32_1 = arith.constant 0 : i32
    return %c0_i32, %c0_i32_0 : i32, i32
  }
  func.func @transform_4(%arg0: i32) -> (i32, i32) {
    %c0_i32 = arith.constant 0 : i32
    %c0_i32_0 = arith.constant 0 : i32
    %c0_i32_1 = arith.constant 0 : i32
    return %c0_i32, %c0_i32_0 : i32, i32
  }
  func.func @transform_5(%arg0: i32) -> (i32, i32) {
    %c0_i32 = arith.constant 0 : i32
    %c0_i32_0 = arith.constant 0 : i32
    return %arg0, %c0_i32 : i32, i32
  }
}

</mosaic_0001>

<llo_original>
// kernel: tpu_custom_call.1
$region0: #{tpu_custom_call.1}
  #allocation0 [shape = 'u32[]', space=smem, size = 0x4, offset = 0x4, fixed_abs, tag = 'smem constant byte address 0x4 - core index']
  #allocation1 [shape = 'u32[144,128]{1,0:T(1,128)}', space=vmem, size = 0x12000, scoped, tag = 'internal scratch']
  %s0 = inlined_call_operand.hbm [shape: f32[16,32], index: 0, kind: input, shape index: {}]
  %s1 = inlined_call_operand.vmem [shape: f32[8,1], index: 1, kind: input, shape index: {}]
  %s2 = inlined_call_operand.hbm [shape: f32[32,32], index: 2, kind: input, shape index: {}]
  %s3 = inlined_call_operand.hbm [shape: f32[32,32], index: 3, kind: input, shape index: {}]
  %s4 = inlined_call_operand.vmem [shape: f32[1,32], index: 4, kind: input, shape index: {}]
  %s5 = inlined_call_operand.hbm [shape: f32[16,32], index: 5, kind: output, shape index: {}]
  %s6 = sld [smem:[#allocation0]]
  $region65: #{tpu_custom_call.1} parent=0
    _
  %s8 = ssub.s32 1, %s6
  %s9 = scalar_select 0, %s8, %s6
  $region1: #{tpu_custom_call.1} parent=0
    #allocation2 [shape = 'u8[8192]{0}', space=vmem, size = 0x2000, scoped, tag = 'input window, operand 0']
    #allocation3 [shape = 's32[2]{0}', space=sflag, size = 0x8, scoped, tag = 'scoped memory for tpu_custom_call.1']
    #allocation4 [shape = 's32[2]{0}', space=sflag, size = 0x8, scoped, tag = 'scoped memory for tpu_custom_call.1']
    #allocation5 [shape = 'u8[16384]{0}', space=vmem, size = 0x4000, scoped, tag = 'input window, operand 2, single buffered']
    #allocation6 [shape = 's32[1]{0}', space=sflag, size = 0x4, scoped, tag = 'scoped memory for tpu_custom_call.1']
    #allocation7 [shape = 'u8[16384]{0}', space=vmem, size = 0x4000, scoped, tag = 'input window, operand 3, single buffered']
    #allocation8 [shape = 'u8[8192]{0}', space=vmem, size = 0x2000, scoped, tag = 'output window, operand 0']
    %10 = vsyncpa [#allocation3], 0
    %s11 = scalar_lea.sflag [#allocation3], 1
    %12 = vsyncpa %s11, 0
    %13 = vsyncpa [#allocation6], 0
    %14 = vsyncpa [#allocation4], 0
    %s15 = scalar_lea.sflag [#allocation4], 1
    %16 = vsyncpa %s15, 0
    loop: start=0, step=1, limit=4
    $region2: #{tpu_custom_call.1} parent=1 // loop_pre_header
      _
    $region3: #{tpu_custom_call.1} parent=1 // loop_header
      %s18 = sphi 0, %s22
      %p19 = scmp.ge.s32.totalorder %s18, 4
      %s28 = sphi 0, %s30
      %s31 = sphi 0, %s28
      %s32 = sphi 0, %s31
      %s48 = sphi 0, %s32
      %s52 = sphi 0, %s52
      %s54 = sphi 0, %s52
      %s55 = sphi 0, %s54
      %s69 = sphi 0, %s55
      %s73 = sphi 0, %s73
      %s75 = sphi 0, %s73
      %s76 = sphi 0, %s75
      %s90 = sphi 0, %s76
      %s94 = sphi 0, %s94
      %s96 = sphi 0, %s94
      %s97 = sphi 0, %s96
      %s111 = sphi 0, %s97
      %s115 = sphi 0, %s115
      %s117 = sphi 0, %s115
      %s118 = sphi 0, %s117
      %s132 = sphi 0, %s118
      %s138 = sphi 0, %s140
      %s141 = sphi 0, %s138
      %s142 = sphi 0, %s141
      %s158 = sphi 0, %s142
    $region4: #{tpu_custom_call.1} parent=1 // loop_header_branch
      %21 = sbr.rel (%p19) target = $region8
    $region5: #{tpu_custom_call.1} parent=1 // loop_body
      %s23 = ssub.s32 %s18, 1
      %s24 = ssub.s32 %s18, 2
      %s25 = sadd.s32 %s18, 1
      %s26 = ssub.s32 %s18, %s25
      %p27 = scmp.eq.s32.totalorder %s26, 0
      %s29 = sadd.s32 %s28, 1
      %s30 = scalar_select %p27, %s28, %s29
      %p33 = pneg %p27
      %p34 = scmp.eq.s32.totalorder %s18, 1
      %p35 = por %p33, %p34
      %p36 = scmp.ne.s32.totalorder %s28, %s31
      %p37 = scmp.eq.s32.totalorder %s18, 0
      %p38 = por %p36, %p37
      %p39 = scmp.ne.s32.totalorder %s28, %s31
      %p40 = scmp.eq.s32.totalorder %s23, 1
      %p41 = por %p39, %p40
      %p42 = scmp.ne.s32.totalorder %s31, %s32
      %p43 = scmp.eq.s32.totalorder %s23, 0
      %p44 = por %p42, %p43
      %p45 = scmp.ne.s32.totalorder %s31, %s32
      %p46 = scmp.eq.s32.totalorder %s24, 1
      %p47 = por %p45, %p46
      %p49 = scmp.ne.s32.totalorder %s32, %s48
      %p50 = scmp.eq.s32.totalorder %s24, 0
      %p51 = por %p49, %p50
      %s53 = sadd.s32 %s52, 1
      %p56 = scmp.eq.s32.totalorder %s18, 1
      %p57 = scmp.ne.s32.totalorder %s52, %s54
      %p58 = scmp.eq.s32.totalorder %s18, 0
      %p59 = por %p57, %p58
      %p60 = scmp.ne.s32.totalorder %s52, %s54
      %p61 = scmp.eq.s32.totalorder %s23, 1
      %p62 = por %p60, %p61
      %p63 = scmp.ne.s32.totalorder %s54, %s55
      %p64 = scmp.eq.s32.totalorder %s23, 0
      %p65 = por %p63, %p64
      %p66 = scmp.ne.s32.totalorder %s54, %s55
      %p67 = scmp.eq.s32.totalorder %s24, 1
      %p68 = por %p66, %p67
      %p70 = scmp.ne.s32.totalorder %s55, %s69
      %p71 = scmp.eq.s32.totalorder %s24, 0
      %p72 = por %p70, %p71
      %s74 = sadd.s32 %s73, 1
      %p77 = scmp.eq.s32.totalorder %s18, 1
      %p78 = scmp.ne.s32.totalorder %s73, %s75
      %p79 = scmp.eq.s32.totalorder %s18, 0
      %p80 = por %p78, %p79
      %p81 = scmp.ne.s32.totalorder %s73, %s75
      %p82 = scmp.eq.s32.totalorder %s23, 1
      %p83 = por %p81, %p82
      %p84 = scmp.ne.s32.totalorder %s75, %s76
      %p85 = scmp.eq.s32.totalorder %s23, 0
      %p86 = por %p84, %p85
      %p87 = scmp.ne.s32.totalorder %s75, %s76
      %p88 = scmp.eq.s32.totalorder %s24, 1
      %p89 = por %p87, %p88
      %p91 = scmp.ne.s32.totalorder %s76, %s90
      %p92 = scmp.eq.s32.totalorder %s24, 0
      %p93 = por %p91, %p92
      %s95 = sadd.s32 %s94, 1
      %p98 = scmp.eq.s32.totalorder %s18, 1
      %p99 = scmp.ne.s32.totalorder %s94, %s96
      %p100 = scmp.eq.s32.totalorder %s18, 0
      %p101 = por %p99, %p100
      %p102 = scmp.ne.s32.totalorder %s94, %s96
      %p103 = scmp.eq.s32.totalorder %s23, 1
      %p104 = por %p102, %p103
      %p105 = scmp.ne.s32.totalorder %s96, %s97
      %p106 = scmp.eq.s32.totalorder %s23, 0
      %p107 = por %p105, %p106
      %p108 = scmp.ne.s32.totalorder %s96, %s97
      %p109 = scmp.eq.s32.totalorder %s24, 1
      %p110 = por %p108, %p109
      %p112 = scmp.ne.s32.totalorder %s97, %s111
      %p113 = scmp.eq.s32.totalorder %s24, 0
      %p114 = por %p112, %p113
      %s116 = sadd.s32 %s115, 1
      %p119 = scmp.eq.s32.totalorder %s18, 1
      %p120 = scmp.ne.s32.totalorder %s115, %s117
      %p121 = scmp.eq.s32.totalorder %s18, 0
      %p122 = por %p120, %p121
      %p123 = scmp.ne.s32.totalorder %s115, %s117
      %p124 = scmp.eq.s32.totalorder %s23, 1
      %p125 = por %p123, %p124
      %p126 = scmp.ne.s32.totalorder %s117, %s118
      %p127 = scmp.eq.s32.totalorder %s23, 0
      %p128 = por %p126, %p127
      %p129 = scmp.ne.s32.totalorder %s117, %s118
      %p130 = scmp.eq.s32.totalorder %s24, 1
      %p131 = por %p129, %p130
      %p133 = scmp.ne.s32.totalorder %s118, %s132
      %p134 = scmp.eq.s32.totalorder %s24, 0
      %p135 = por %p133, %p134
      %s136 = ssub.s32 %s18, %s25
      %p137 = scmp.eq.s32.totalorder %s136, 0
      %s139 = sadd.s32 %s138, 1
      %s140 = scalar_select %p137, %s138, %s139
      %p143 = pneg %p137
      %p144 = scmp.eq.s32.totalorder %s18, 1
      %p145 = por %p143, %p144
      %p146 = scmp.ne.s32.totalorder %s138, %s141
      %p147 = scmp.eq.s32.totalorder %s18, 0
      %p148 = por %p146, %p147
      %p149 = scmp.ne.s32.totalorder %s138, %s141
      %p150 = scmp.eq.s32.totalorder %s23, 1
      %p151 = por %p149, %p150
      %p152 = scmp.ne.s32.totalorder %s141, %s142
      %p153 = scmp.eq.s32.totalorder %s23, 0
      %p154 = por %p152, %p153
      %p155 = scmp.ne.s32.totalorder %s141, %s142
      %p156 = scmp.eq.s32.totalorder %s24, 1
      %p157 = por %p155, %p156
      %p159 = scmp.ne.s32.totalorder %s142, %s158
      %p160 = scmp.eq.s32.totalorder %s24, 0
      %p161 = por %p159, %p160
      %p162 = scmp.le.s32.totalorder 1, %s18
      %p163 = scmp.lt.s32.totalorder %s18, 3
      %p164 = pnand %p162, %p163
      %p165 = pneg %p164
      // Predicated region
      $region9: #{tpu_custom_call.1} parent=5 // pred_check
        _
      $region10: #{tpu_custom_call.1} parent=5 // pred_check_branch
        %167 = sbr.rel (%p164) target = $region12
      $region11: #{tpu_custom_call.1} parent=5 // pred_region
        %s168 = ssub.s32 %s18, 1
        // Predicated region
        $region13: #{tpu_custom_call.1} parent=11 // pred_check
          %p169 = pneg %p65
        $region14: #{tpu_custom_call.1} parent=11 // pred_check_branch
          %171 = sbr.rel (%p169) target = $region16
        $region15: #{tpu_custom_call.1} parent=11 // pred_region
          _
        $region16: #{tpu_custom_call.1} parent=11 // pred_fallthru
          _
        // Predicated region
        $region17: #{tpu_custom_call.1} parent=11 // pred_check
          %p172 = pneg %p86
        $region18: #{tpu_custom_call.1} parent=11 // pred_check_branch
          %174 = sbr.rel (%p172) target = $region20
        $region19: #{tpu_custom_call.1} parent=11 // pred_region
          %s176 = ssub.s32 512, 512
          %177 = vsyncadd [#allocation6], %s176
          %s178 = sshll.u32 [#allocation5], 4
          %s179 = int_to_ptr.vmem [resolvable:$true] %s178
          %184 = dma.hbm_to_vmem [thread:$0]  %s2, 512, %s179, [#allocation6], 128, 128, 8
        $region20: #{tpu_custom_call.1} parent=11 // pred_fallthru
          _
        // Predicated region
        $region21: #{tpu_custom_call.1} parent=11 // pred_check
          %p185 = pneg %p107
        $region22: #{tpu_custom_call.1} parent=11 // pred_check_branch
          %187 = sbr.rel (%p185) target = $region24
        $region23: #{tpu_custom_call.1} parent=11 // pred_region
          %s189 = ssub.s32 512, 512
          %190 = vsyncadd [#allocation6], %s189
          %s191 = sshll.u32 [#allocation7], 4
          %s192 = int_to_ptr.vmem [resolvable:$true] %s191
          %197 = dma.hbm_to_vmem [thread:$0]  %s3, 512, %s192, [#allocation6], 128, 128, 8
        $region24: #{tpu_custom_call.1} parent=11 // pred_fallthru
          _
        // Predicated region
        $region25: #{tpu_custom_call.1} parent=11 // pred_check
          %p198 = pneg %p128
        $region26: #{tpu_custom_call.1} parent=11 // pred_check_branch
          %200 = sbr.rel (%p198) target = $region28
        $region27: #{tpu_custom_call.1} parent=11 // pred_region
          _
        $region28: #{tpu_custom_call.1} parent=11 // pred_fallthru
          _
      $region12: #{tpu_custom_call.1} parent=5 // pred_fallthru
        _
      %p201 = scmp.lt.s32.totalorder %s18, 2
      // Predicated region
      $region29: #{tpu_custom_call.1} parent=5 // pred_check
        %p202 = pneg %p201
      $region30: #{tpu_custom_call.1} parent=5 // pred_check_branch
        %204 = sbr.rel (%p202) target = $region32
      $region31: #{tpu_custom_call.1} parent=5 // pred_region
        // Predicated region
        $region33: #{tpu_custom_call.1} parent=31 // pred_check
          %p205 = pneg %p38
        $region34: #{tpu_custom_call.1} parent=31 // pred_check_branch
          %207 = sbr.rel (%p205) target = $region36
        $region35: #{tpu_custom_call.1} parent=31 // pred_region
          %s208 = sand.u32 %s28, 1
          %s209 = scalar_lea.sflag [#allocation3], %s208
          %s210 = sand.u32 %s28, 1
          %s211 = smul.addr %s210, 8
          %s212 = scalar_lea.vmem [#allocation2], %s211
          %s214 = ssub.s32 128, 128
          %215 = vsyncadd %s209, %s214
          %s216 = smul.addr %s18, 128
          %s217 = scalar_lea.hbm %s0, %s216
          %s219 = sshll.u32 %s212, 4
          %s220 = int_to_ptr.vmem [resolvable:$true] %s219
          %222 = dma.hbm_to_vmem [thread:$0]  %s217, 128, %s220, %s209
        $region36: #{tpu_custom_call.1} parent=31 // pred_fallthru
          _
      $region32: #{tpu_custom_call.1} parent=5 // pred_fallthru
        _
      %p223 = scmp.le.s32.totalorder 1, %s18
      %p224 = scmp.lt.s32.totalorder %s18, 3
      %p225 = pnand %p223, %p224
      %p226 = pneg %p225
      // Predicated region
      $region37: #{tpu_custom_call.1} parent=5 // pred_check
        _
      $region38: #{tpu_custom_call.1} parent=5 // pred_check_branch
        %228 = sbr.rel (%p225) target = $region40
      $region39: #{tpu_custom_call.1} parent=5 // pred_region
        %s229 = ssub.s32 %s18, 1
        %s230 = sand.u32 %s31, 1
        %s231 = scalar_lea.sflag [#allocation3], %s230
        %s232 = sand.u32 %s31, 1
        %s233 = smul.addr %s232, 8
        %s234 = scalar_lea.vmem [#allocation2], %s233
        // Predicated region
        $region41: #{tpu_custom_call.1} parent=39 // pred_check
          %p235 = pneg %p44
        $region42: #{tpu_custom_call.1} parent=39 // pred_check_branch
          %237 = sbr.rel (%p235) target = $region44
        $region43: #{tpu_custom_call.1} parent=39 // pred_region
          %238 = dma.done %s231, 128
        $region44: #{tpu_custom_call.1} parent=39 // pred_fallthru
          _
        // Predicated region
        $region45: #{tpu_custom_call.1} parent=39 // pred_check
          %p239 = pneg %p86
        $region46: #{tpu_custom_call.1} parent=39 // pred_check_branch
          %241 = sbr.rel (%p239) target = $region48
        $region47: #{tpu_custom_call.1} parent=39 // pred_region
          %242 = dma.done [#allocation6], 512
        $region48: #{tpu_custom_call.1} parent=39 // pred_fallthru
          _
        // Predicated region
        $region49: #{tpu_custom_call.1} parent=39 // pred_check
          %p243 = pneg %p107
        $region50: #{tpu_custom_call.1} parent=39 // pred_check_branch
          %245 = sbr.rel (%p243) target = $region52
        $region51: #{tpu_custom_call.1} parent=39 // pred_region
          %246 = dma.done [#allocation6], 512
        $region52: #{tpu_custom_call.1} parent=39 // pred_fallthru
          _
        %s247 = sand.u32 %s31, 1
        %s248 = scalar_lea.sflag [#allocation3], %s247
        %s249 = sand.u32 %s31, 1
        %s250 = smul.addr %s249, 8
        %s251 = scalar_lea.vmem [#allocation2], %s250
        %p252 = pneg %p44
        %p253 = pneg %p41
        %p254 = pneg %p65
        %p255 = pneg %p62
        %p256 = pneg %p86
        %p257 = pneg %p83
        %p258 = pneg %p107
        %p259 = pneg %p104
        %p260 = pneg %p128
        %p261 = pneg %p125
        %p262 = pneg %p154
        %p263 = pneg %p151
        %s264 = sand.u32 %s141, 1
        %s265 = scalar_lea.sflag [#allocation4], %s264
        %s266 = sand.u32 %s141, 1
        %s267 = smul.addr %s266, 8
        %s268 = scalar_lea.vmem [#allocation8], %s267
        %v269 = vld [vmem:[%s234] sm:$0xff]
        %v270 = vrot.slane %v269, 7
        %v271 = vld [vmem:[%s1] sm:$0xff]
        %273 = vset.pattern.permute.xlu0 0
        %274 = vperm.xlu0 %273, %v271
        %v275 = vpop.permute.xlu0 %274
        %v277 = vmul.f32 %v270, %v275
        %v278 = vld [vmem:[#allocation5] sm:$0xff]
        %v279 = vld [vmem:[#allocation5 + $0x8] sm:$0xff]
        %v280 = vld [vmem:[#allocation5 + $0x10] sm:$0xff]
        %v281 = vld [vmem:[#allocation5 + $0x18] sm:$0xff]
        %v282 = vld [vmem:[#allocation7] sm:$0xff]
        %v283 = vld [vmem:[#allocation7 + $0x8] sm:$0xff]
        %v284 = vld [vmem:[#allocation7 + $0x10] sm:$0xff]
        %v285 = vld [vmem:[#allocation7 + $0x18] sm:$0xff]
        %vm286 = vcmask 261120
        %v288 = vsel %vm286, %v277, 0
        %290 = vmatprep.subr.mxu0 0.0
        %291 = vmatpush1.msra.mxu0 %v282
        %292 = vmatprep.subr.mxu0 0.0
        %293 = vmatpush1.msra.mxu0 %v283
        %294 = vmatprep.subr.mxu0 0.0
        %295 = vmatpush1.msra.mxu0 %v284
        %296 = vmatprep.subr.mxu0 0.0
        %297 = vmatpush1.msra.mxu0 %v285
        %298 = vmatprep.subr.mxu0 0.0
        %299 = vmatpush1.msra.mxu0 0.0
        %300 = vmatprep.subr.mxu0 0.0
        %301 = vmatpush1.msra.mxu0 0.0
        %302 = vmatprep.subr.mxu0 0.0
        %303 = vmatpush1.msra.mxu0 0.0
        %304 = vmatprep.subr.mxu0 0.0
        %305 = vmatpush1.msra.mxu0 0.0
        %306 = vmatprep.subr.mxu0 0.0
        %307 = vmatpush1.msra.mxu0 0.0
        %308 = vmatprep.subr.mxu0 0.0
        %309 = vmatpush1.msra.mxu0 0.0
        %310 = vmatprep.subr.mxu0 0.0
        %311 = vmatpush1.msra.mxu0 0.0
        %312 = vmatprep.subr.mxu0 0.0
        %313 = vmatpush1.msra.mxu0 0.0
        %314 = vmatprep.subr.mxu0 0.0
        %315 = vmatpush1.msra.mxu0 0.0
        %316 = vmatprep.subr.mxu0 0.0
        %317 = vmatpush1.msra.mxu0 0.0
        %318 = vmatprep.subr.mxu0 0.0
        %319 = vmatpush1.msra.mxu0 0.0
        %320 = vmatprep.subr.mxu0 0.0
        %321 = vmatpush1.msra.mxu0 0.0
        %322 = vmatprep.subr.mxu0 0.0
        %323 = vmatpush1.msra.mxu0 0.0
        %324 = vmatprep.subr.mxu0 0.0
        %325 = vmatpush1.msra.mxu0 0.0
        %326 = vmatprep.subr.mxu0 0.0
        %327 = vmatpush1.msra.mxu0 0.0
        %328 = vmatprep.subr.mxu0 0.0
        %329 = vmatpush1.msra.mxu0 0.0
        %330 = vmatprep.subr.mxu0 0.0
        %331 = vmatpush1.msra.mxu0 0.0
        %332 = vmatprep.subr.mxu0 0.0
        %333 = vmatpush1.msra.mxu0 0.0
        %334 = vmatprep.subr.mxu0 0.0
        %335 = vmatpush1.msra.mxu0 0.0
        %336 = vmatprep.subr.mxu0 0.0
        %337 = vmatpush1.msra.mxu0 0.0
        %338 = vmatprep.subr.mxu0 0.0
        %339 = vmatpush1.msra.mxu0 0.0
        %340 = vmatprep.subr.mxu0 0.0
        %341 = vmatpush1.msra.mxu0 0.0
        %342 = vmatprep.subr.mxu0 0.0
        %343 = vmatpush1.msra.mxu0 0.0
        %344 = vmatprep.subr.mxu0 0.0
        %345 = vmatpush1.msra.mxu0 0.0
        %346 = vmatprep.subr.mxu0 0.0
        %347 = vmatpush1.msra.mxu0 0.0
        %348 = vmatprep.subr.mxu0 0.0
        %349 = vmatpush1.msra.mxu0 0.0
        %350 = vmatprep.subr.mxu0 0.0
        %351 = vmatpush1.msra.mxu0 0.0
        %352 = vmatprep.subr.mxu0 0.0
        %353 = vmatpush1.msra.mxu0 0.0
        %354 = vmatprep.mubr.f32.mxu0 0.0
        %355 = vmatmul.mubr.f32.gmra.mrb[0].mxu0 %v288
        %v356 = vpop.f32.mrb[0].mxu0
        %v357 = vadd.f32 0.0, %v356
        %v358 = vpop.f32.mrb[0].mxu0
        %359 = vdwg.mxu0
        %v361 = vsel %vm286, %v269, 0
        %363 = vmatprep.subr.mxu0 0.0
        %364 = vmatpush1.msra.mxu0 %v278
        %365 = vmatprep.subr.mxu0 0.0
        %366 = vmatpush1.msra.mxu0 %v279
        %367 = vmatprep.subr.mxu0 0.0
        %368 = vmatpush1.msra.mxu0 %v280
        %369 = vmatprep.subr.mxu0 0.0
        %370 = vmatpush1.msra.mxu0 %v281
        %371 = vmatprep.subr.mxu0 0.0
        %372 = vmatpush1.msra.mxu0 0.0
        %373 = vmatprep.subr.mxu0 0.0
        %374 = vmatpush1.msra.mxu0 0.0
        %375 = vmatprep.subr.mxu0 0.0
        %376 = vmatpush1.msra.mxu0 0.0
        %377 = vmatprep.subr.mxu0 0.0
        %378 = vmatpush1.msra.mxu0 0.0
        %379 = vmatprep.subr.mxu0 0.0
        %380 = vmatpush1.msra.mxu0 0.0
        %381 = vmatprep.subr.mxu0 0.0
        %382 = vmatpush1.msra.mxu0 0.0
        %383 = vmatprep.subr.mxu0 0.0
        %384 = vmatpush1.msra.mxu0 0.0
        %385 = vmatprep.subr.mxu0 0.0
        %386 = vmatpush1.msra.mxu0 0.0
        %387 = vmatprep.subr.mxu0 0.0
        %388 = vmatpush1.msra.mxu0 0.0
        %389 = vmatprep.subr.mxu0 0.0
        %390 = vmatpush1.msra.mxu0 0.0
        %391 = vmatprep.subr.mxu0 0.0
        %392 = vmatpush1.msra.mxu0 0.0
        %393 = vmatprep.subr.mxu0 0.0
        %394 = vmatpush1.msra.mxu0 0.0
        %395 = vmatprep.subr.mxu0 0.0
        %396 = vmatpush1.msra.mxu0 0.0
        %397 = vmatprep.subr.mxu0 0.0
        %398 = vmatpush1.msra.mxu0 0.0
        %399 = vmatprep.subr.mxu0 0.0
        %400 = vmatpush1.msra.mxu0 0.0
        %401 = vmatprep.subr.mxu0 0.0
        %402 = vmatpush1.msra.mxu0 0.0
        %403 = vmatprep.subr.mxu0 0.0
        %404 = vmatpush1.msra.mxu0 0.0
        %405 = vmatprep.subr.mxu0 0.0
        %406 = vmatpush1.msra.mxu0 0.0
        %407 = vmatprep.subr.mxu0 0.0
        %408 = vmatpush1.msra.mxu0 0.0
        %409 = vmatprep.subr.mxu0 0.0
        %410 = vmatpush1.msra.mxu0 0.0
        %411 = vmatprep.subr.mxu0 0.0
        %412 = vmatpush1.msra.mxu0 0.0
        %413 = vmatprep.subr.mxu0 0.0
        %414 = vmatpush1.msra.mxu0 0.0
        %415 = vmatprep.subr.mxu0 0.0
        %416 = vmatpush1.msra.mxu0 0.0
        %417 = vmatprep.subr.mxu0 0.0
        %418 = vmatpush1.msra.mxu0 0.0
        %419 = vmatprep.subr.mxu0 0.0
        %420 = vmatpush1.msra.mxu0 0.0
        %421 = vmatprep.subr.mxu0 0.0
        %422 = vmatpush1.msra.mxu0 0.0
        %423 = vmatprep.subr.mxu0 0.0
        %424 = vmatpush1.msra.mxu0 0.0
        %425 = vmatprep.subr.mxu0 0.0
        %426 = vmatpush1.msra.mxu0 0.0
        %427 = vmatprep.mubr.f32.mxu0 0.0
        %428 = vmatmul.mubr.f32.gmra.mrb[0].mxu0 %v361
        %v429 = vpop.f32.mrb[0].mxu0
        %v430 = vadd.f32 %v357, %v429
        %v431 = vpop.f32.mrb[0].mxu0
        %432 = vdwg.mxu0
        %v433 = vld [vmem:[%s4] sm:$0x1]
        %v435 = vlaneseq
        %v436 = vshrl.u32 %v435, 7
        %v437 = vsub.s32 0, %v436
        %v438 = vrot.slane %v433, %v437
        %v440 = vadd.f32 %v430, %v438
        %v441 = vmax.f32 %v440, 0.0
        %442 = vst.msk [vmem:[%s268] sm:$0xff] %vm286, %v441
        %s443 = sand.u32 %s141, 1
        %s444 = scalar_lea.sflag [#allocation4], %s443
        %s445 = sand.u32 %s141, 1
        %s446 = smul.addr %s445, 8
        %s447 = scalar_lea.vmem [#allocation8], %s446
        // Predicated region
        $region53: #{tpu_custom_call.1} parent=39 // pred_check
          %p448 = pneg %p151
        $region54: #{tpu_custom_call.1} parent=39 // pred_check_branch
          %450 = sbr.rel (%p448) target = $region56
        $region55: #{tpu_custom_call.1} parent=39 // pred_region
          %s452 = ssub.s32 128, 128
          %453 = vsyncadd %s444, %s452
          %s454 = smul.addr %s23, 128
          %s455 = scalar_lea.hbm %s5, %s454
          %s457 = sshll.u32 %s447, 4
          %s458 = int_to_ptr.vmem [resolvable:$true] %s457
          %460 = dma.vmem_to_hbm [thread:$0]  %s458, 128, %s455, %s444
        $region56: #{tpu_custom_call.1} parent=39 // pred_fallthru
          _
      $region40: #{tpu_custom_call.1} parent=5 // pred_fallthru
        _
      %p461 = scmp.le.s32.totalorder 2, %s18
      // Predicated region
      $region57: #{tpu_custom_call.1} parent=5 // pred_check
        %p462 = pneg %p461
      $region58: #{tpu_custom_call.1} parent=5 // pred_check_branch
        %464 = sbr.rel (%p462) target = $region60
      $region59: #{tpu_custom_call.1} parent=5 // pred_region
        %s465 = ssub.s32 %s18, 2
        // Predicated region
        $region61: #{tpu_custom_call.1} parent=59 // pred_check
          %p466 = pneg %p157
        $region62: #{tpu_custom_call.1} parent=59 // pred_check_branch
          %468 = sbr.rel (%p466) target = $region64
        $region63: #{tpu_custom_call.1} parent=59 // pred_region
          %s469 = sand.u32 %s142, 1
          %s470 = scalar_lea.sflag [#allocation4], %s469
          %s471 = sand.u32 %s142, 1
          %s472 = smul.addr %s471, 8
          %s473 = scalar_lea.vmem [#allocation8], %s472
          %474 = dma.done %s470, 128
        $region64: #{tpu_custom_call.1} parent=59 // pred_fallthru
          _
      $region60: #{tpu_custom_call.1} parent=5 // pred_fallthru
        _
    $region6: #{tpu_custom_call.1} parent=1 // loop_footer
      %s22 = sadd.s32 1, %s18
    $region7: #{tpu_custom_call.1} parent=1 // loop_footer_branch
      %17 = sbr.rel target = $region3
    $region8: #{tpu_custom_call.1} parent=1 // loop_exit
      _
    %475 = vsyncpa [#allocation3], 1
    %s476 = scalar_lea.sflag [#allocation3], 1
    %477 = vsyncpa %s476, 1
    %478 = vsyncpa [#allocation6], 1
    %479 = vsyncpa [#allocation4], 1
    %s480 = scalar_lea.sflag [#allocation4], 1
    %481 = vsyncpa %s480, 1

</llo_original>
